<compile_context>
chip_gen: v7x
topology: tpu7x:2x2x1
jax: 0.10.0
libtpu: 0.0.40
codegen_flags: <defaults>
</compile_context>

<pallas_src>
import math

import jax
import jax.numpy as jnp
from jax.experimental import pallas as pl
from jax.experimental.pallas import tpu as pltpu


_TARGET_TILE_BYTES = 4 * 1024 * 1024   # ~4 MiB/tile; in+out double-buffered -> 16 MiB
_VMEM_LIMIT_BYTES = 32 * 1024 * 1024   # explicit scoped-VMEM limit, safe on v5e/v6e/v7x
_MIN_SPLIT_BYTES = 512 * 1024          # only force a >=2-step grid above this size


def _flatten_copy_kernel(x_ref, o_ref):
    # Lane-dense identity copy of one (tb, tf) tile.  The flatten itself is a
    # free (metadata-only) reshape in the wrapper, so nothing inside the
    # kernel crosses (8, 128) tile boundaries -> straight vld/vst + DMA.
    o_ref[...] = x_ref[...]


def _round_up(x: int, m: int) -> int:
    return ((x + m - 1) // m) * m


def _sublane_align(itemsize: int) -> int:
    # Sublane packing: 8 rows f32 / 16 bf16 / 32 int8-fp8.
    return max(8, 32 // itemsize)


def _lane_cap(itemsize: int) -> int:
    # Widest lane tile (multiple of 128) that still respects the byte budget
    # at a minimal sub_align-row tile height.
    sub = _sublane_align(itemsize)
    cap = (_TARGET_TILE_BYTES // (sub * itemsize)) // 128 * 128
    return max(128, cap)


def _fold_view(B: int, F: int, itemsize: int) -> tuple[int, int]:
    """DMA-friendly 2-D folding (R, L) of the contiguous (B, F) buffer with
    R * L == B * F.  Decouples tiling from B/F factorization; both reshapes
    (to this view and back) are metadata-only for a contiguous array."""
    N = B * F
    if N % 128 != 0:
        return B, F                      # no 128-aligned folding exists
    cap = _lane_cap(itemsize)
    L = 128
    cand = min(cap, (N // 128) * 128)
    while cand >= 128:
        if N % cand == 0:
            L = cand
            break
        cand -= 128
    return N // L, L


def _pick_tiles(R: int, L: int, itemsize: int) -> tuple[int, int]:
    """Capped, aligned tile sizes (never a huge full-extent fallback)."""
    sub = _sublane_align(itemsize)
    cap = _lane_cap(itemsize)
    tf = L if L <= cap else cap                            # full dim, or capped mult of 128
    row_bytes = max(1, tf * itemsize)
    tb_cap = max(sub, (_TARGET_TILE_BYTES // row_bytes) // sub * sub)
    tb = R if R <= tb_cap else tb_cap                      # full dim, or capped mult of sub

    # Guarantee >=2 parallel grid steps for mid/large arrays so the copy can
    # shard across v7x's two TensorCores (tiny arrays: launch overhead wins).
    if (pl.cdiv(R, tb) * pl.cdiv(L, tf) == 1
            and R * L * itemsize >= _MIN_SPLIT_BYTES):
        if L >= 256:
            tf = _round_up(pl.cdiv(L, 2), 128)
        elif R >= 2 * sub:
            tb = _round_up(pl.cdiv(R, 2), sub)
    return tb, tf


def _flatten_pallas(x: jax.Array) -> jax.Array:
    """Explicit Pallas identity-copy materialization of x.reshape(B, -1)."""
    B = x.shape[0]
    F = math.prod(x.shape[1:]) if x.ndim > 1 else 1
    itemsize = jnp.dtype(x.dtype).itemsize

    R, L = _fold_view(B, F, itemsize)
    x2 = x.reshape(R, L)                                   # metadata-only
    tb, tf = _pick_tiles(R, L, itemsize)
    grid = (pl.cdiv(R, tb), pl.cdiv(L, tf))

    y2 = pl.pallas_call(
        _flatten_copy_kernel,
        out_shape=jax.ShapeDtypeStruct((R, L), x.dtype),
        grid_spec=pltpu.PrefetchScalarGridSpec(
            num_scalar_prefetch=0,
            grid=grid,
            in_specs=[pl.BlockSpec((tb, tf), lambda i, j: (i, j))],
            out_specs=pl.BlockSpec((tb, tf), lambda i, j: (i, j)),
        ),
        compiler_params=pltpu.CompilerParams(
            dimension_semantics=("parallel", "parallel"),
            vmem_limit_bytes=_VMEM_LIMIT_BYTES,
        ),
        cost_estimate=pl.CostEstimate(
            flops=0,
            transcendentals=0,
            bytes_accessed=2 * R * L * itemsize,
        ),
    )(x2)
    return y2.reshape(B, F)                                # metadata-only


def flatten(x: jax.Array, *, materialize: bool = False) -> jax.Array:
    """Equivalent of torch `x.view(x.size(0), -1)`.

    Default: metadata-only reshape (zero HBM traffic) — nothing can beat not
    copying.  `materialize=True` routes through the Pallas identity-copy
    kernel as an explicit materialization / fusion point."""
    B = x.shape[0]
    if not materialize:
        return x.reshape(B, -1)
    return _flatten_pallas(x)


if __name__ == "__main__":
    key = jax.random.PRNGKey(0)
    B, C, H, W = 2, 4, 16, 16
    x = jax.random.normal(key, (B, C, H, W), dtype=jnp.float32)

    y_fast = flatten(x)                        # production path (free reshape)
    y_kern = flatten(x, materialize=True)      # explicit Pallas copy kernel
    jax.block_until_ready(y_kern)

    y_ref = x.reshape(B, -1)
    assert y_kern.shape == (B, C * H * W), y_kern.shape
    assert y_kern.dtype == x.dtype
    assert jnp.array_equal(y_fast, y_ref), "reshape path mismatch"
    assert jnp.array_equal(y_kern, y_ref), "Pallas flatten mismatch vs reference"

    # Ragged / non-128-multiple feature size: exercises the capped-tile +
    # masked-edge path (no full-extent fallback, no VMEM blowup).
    x_odd = jax.random.normal(jax.random.PRNGKey(1), (3, 5, 10, 10), dtype=jnp.float32)
    y_odd = flatten(x_odd, materialize=True)
    jax.block_until_ready(y_odd)
    assert jnp.array_equal(y_odd, x_odd.reshape(3, -1)), "ragged-shape mismatch"

    print("KERNEL_OK")
</pallas_src>

<mosaic_0001>
module attributes {stable_mosaic.version = 11 : i64} {
  func.func @_flatten_copy_kernel(%arg0: i32, %arg1: i32, %arg2: memref<1x2048xf32, #tpu.memory_space<vmem>>, %arg3: memref<1x2048xf32, #tpu.memory_space<vmem>>) attributes {dimension_semantics = [#tpu.dimension_semantics<parallel>, #tpu.dimension_semantics<parallel>], iteration_bounds = array<i64: 1, 1>, scalar_prefetch = 0 : i64, scratch_operands = 0 : i64, tpu.core_type = #tpu.core_type<tc>, window_params = [{transform_indices = @transform_0, window_bounds = array<i64: 1, 2048>}, {transform_indices = @transform_1, window_bounds = array<i64: 1, 2048>}]} {
    %c0 = arith.constant 0 : index
    %c0_0 = arith.constant 0 : index
    %0 = vector.load %arg2[%c0, %c0_0] : memref<1x2048xf32, #tpu.memory_space<vmem>>, vector<1x2048xf32>
    %c0_1 = arith.constant 0 : index
    %c0_2 = arith.constant 0 : index
    %1 = vector.load %arg3[%c0_1, %c0_2] : memref<1x2048xf32, #tpu.memory_space<vmem>>, vector<1x2048xf32>
    tpu.vector_store %arg3[%c0_1, %c0_2], %0 {strides = array<i32>} : memref<1x2048xf32, #tpu.memory_space<vmem>>, vector<1x2048xf32>,
    return
  }
  func.func @transform_0(%arg0: i32, %arg1: i32) -> (i32, i32) {
    %c0_i32 = arith.constant 0 : i32
    return %arg0, %arg1 : i32, i32
  }
  func.func @transform_1(%arg0: i32, %arg1: i32) -> (i32, i32) {
    %c0_i32 = arith.constant 0 : i32
    return %arg0, %arg1 : i32, i32
  }
}

</mosaic_0001>

<llo_original>
// kernel: tpu_custom_call.1
$region0: #{tpu_custom_call.1}
  #allocation0 [shape = 'u32[]', space=smem, size = 0x4, offset = 0x4, fixed_abs, tag = 'smem constant byte address 0x4 - core index']
  #allocation1 [shape = 'u32[144,128]{1,0:T(1,128)}', space=vmem, size = 0x12000, scoped, tag = 'internal scratch']
  %s0 = inlined_call_operand.hbm [shape: f32[1,2048], index: 0, kind: input, shape index: {}]
  %s1 = inlined_call_operand.hbm [shape: f32[1,2048], index: 1, kind: output, shape index: {}]
  %s2 = sld [smem:[#allocation0]]
  $region18: #{tpu_custom_call.1} parent=0
    _
  %s4 = ssub.s32 1, %s2
  %s5 = scalar_select 0, %s4, %s2
  $region1: #{tpu_custom_call.1} parent=0
    #allocation2 [shape = 'u8[8192]{0}', space=vmem, size = 0x2000, scoped, tag = 'input window, operand 0, single buffered']
    #allocation3 [shape = 's32[1]{0}', space=sflag, size = 0x4, scoped, tag = 'scoped memory for tpu_custom_call.1']
    #allocation4 [shape = 's32[1]{0}', space=sflag, size = 0x4, scoped, tag = 'scoped memory for tpu_custom_call.1']
    #allocation5 [shape = 'u8[8192]{0}', space=vmem, size = 0x2000, scoped, tag = 'output window, operand 0, single buffered']
    %6 = vsyncpa [#allocation3], 0
    %7 = vsyncpa [#allocation4], 0
    // Predicated region
    $region2: #{tpu_custom_call.1} parent=1 // pred_check
      _
    $region3: #{tpu_custom_call.1} parent=1 // pred_check_branch
      %9 = sbr.rel (0) target = $region5
    $region4: #{tpu_custom_call.1} parent=1 // pred_region
      %s11 = ssub.s32 256, 256
      %12 = vsyncadd [#allocation3], %s11
      %s14 = sshll.u32 [#allocation2], 4
      %s15 = int_to_ptr.vmem [resolvable:$true] %s14
      %17 = dma.hbm_to_vmem [thread:$0]  %s0, 256, %s15, [#allocation3]
    $region5: #{tpu_custom_call.1} parent=1 // pred_fallthru
      _
    // Predicated region
    $region6: #{tpu_custom_call.1} parent=1 // pred_check
      _
    $region7: #{tpu_custom_call.1} parent=1 // pred_check_branch
      %19 = sbr.rel (0) target = $region9
    $region8: #{tpu_custom_call.1} parent=1 // pred_region
      %20 = dma.done [#allocation3], 256
    $region9: #{tpu_custom_call.1} parent=1 // pred_fallthru
      _
    %v21 = vld [vmem:[#allocation2] sm:$0xff]
    %v22 = vld [vmem:[#allocation2 + $0x8] sm:$0xff]
    %23 = vst [vmem:[#allocation5] sm:$0xff] %v21
    %24 = vst [vmem:[#allocation5 + $0x8] sm:$0xff] %v22
    // Predicated region
    $region10: #{tpu_custom_call.1} parent=1 // pred_check
      _
    $region11: #{tpu_custom_call.1} parent=1 // pred_check_branch
      %26 = sbr.rel (0) target = $region13
    $region12: #{tpu_custom_call.1} parent=1 // pred_region
      %s28 = ssub.s32 256, 256
      %29 = vsyncadd [#allocation4], %s28
      %s31 = sshll.u32 [#allocation5], 4
      %s32 = int_to_ptr.vmem [resolvable:$true] %s31
      %34 = dma.vmem_to_hbm [thread:$0]  %s32, 256, %s1, [#allocation4]
    $region13: #{tpu_custom_call.1} parent=1 // pred_fallthru
      _
    // Predicated region
    $region14: #{tpu_custom_call.1} parent=1 // pred_check
      _
    $region15: #{tpu_custom_call.1} parent=1 // pred_check_branch
      %36 = sbr.rel (0) target = $region17
    $region16: #{tpu_custom_call.1} parent=1 // pred_region
      %37 = dma.done [#allocation4], 256
    $region17: #{tpu_custom_call.1} parent=1 // pred_fallthru
      _
    %38 = vsyncpa [#allocation3], 1
    %39 = vsyncpa [#allocation4], 1

</llo_original>
